<compile_context>
chip_gen: v7x
topology: tpu7x:2x2x1
jax: 0.10.0
libtpu: 0.0.40
codegen_flags: <defaults>
</compile_context>

<pallas_src>
import jax
import jax.numpy as jnp
from jax.experimental import pallas as pl
from jax.experimental.pallas import tpu as pltpu

# Small, forward-consistent shapes.
B = 8        # batch per branch
D = 16       # input feature dim
H = 32       # hidden dim
E = 8        # embedding dim
E_PAD = 128  # embedding dim padded to one full lane width for unmasked stores
B2 = 2 * B   # fused batch (both branches stacked along sublanes)


def _siamese_kernel(x1_ref, x2_ref, w1_ref, b1_ref, w2_ref, b2_ref, o_ref):
    """Both Siamese branches fused into a single gridless matmul chain.

    Weight sharing == the same VMEM-resident w1/b1/w2/b2 are used for the
    whole [2B, D] fused LHS.
    """
    # Cheap sublane concat of two VMEM-resident [B, D] tiles -> [2B, D].
    x = jnp.concatenate([x1_ref[...], x2_ref[...]], axis=0)

    h = jnp.dot(x, w1_ref[...], preferred_element_type=jnp.float32) + b1_ref[...]
    h = jnp.maximum(h, 0.0)                                            # ReLU
    y = jnp.dot(h, w2_ref[...], preferred_element_type=jnp.float32) + b2_ref[...]

    # Single lane-dense (16, 128) store (two full unmasked f32 vregs).
    o_ref[...] = y.astype(o_ref.dtype)


def prepare_params(params):
    """One-time parameter prep: zero-pad the output-facing weight/bias to
    lane width so every in-kernel store is lane-dense.  Call ONCE at init
    (outside the per-forward jit) and reuse the result."""
    w1, b1, w2, b2 = params
    w2p = jnp.zeros((H, E_PAD), w2.dtype).at[:, :E].set(w2)
    b2p = jnp.zeros((1, E_PAD), b2.dtype).at[:, :E].set(b2)
    return (w1, b1, w2p, b2p)


def siamese_forward(x1, x2, padded_params):
    """Returns (output1, output2) = (embed(x1), embed(x2)) with shared weights."""
    w1, b1, w2p, b2p = padded_params

    vmem = pl.BlockSpec(memory_space=pltpu.MemorySpace.VMEM)

    o = pl.pallas_call(
        _siamese_kernel,
        out_shape=jax.ShapeDtypeStruct((B2, E_PAD), jnp.float32),
        in_specs=[vmem, vmem, vmem, vmem, vmem, vmem],
        out_specs=vmem,
    )(x1, x2, w1, b1, w2p, b2p)

    # Split fused output back into the two branches; padded lanes are exact 0s.
    return o[:B, :E], o[B:, :E]


def _reference_embed(x, params):
    w1, b1, w2, b2 = params
    h = jnp.maximum(x @ w1 + b1, 0.0)
    return h @ w2 + b2


if __name__ == "__main__":
    key = jax.random.PRNGKey(0)
    k_x1, k_x2, k_w1, k_b1, k_w2, k_b2 = jax.random.split(key, 6)

    # Deterministic synthetic parameters (already transposed to [in, out]).
    w1 = jax.random.normal(k_w1, (D, H), jnp.float32) * 0.1
    b1 = jax.random.normal(k_b1, (1, H), jnp.float32) * 0.1
    w2 = jax.random.normal(k_w2, (H, E), jnp.float32) * 0.1
    b2 = jax.random.normal(k_b2, (1, E), jnp.float32) * 0.1
    params = (w1, b1, w2, b2)

    # One-time padding, hoisted out of the per-call path.
    padded_params = jax.tree_util.tree_map(
        jax.block_until_ready, prepare_params(params))

    x1 = jax.random.normal(k_x1, (B, D), jnp.float32)
    x2 = jax.random.normal(k_x2, (B, D), jnp.float32)

    fwd = jax.jit(siamese_forward)
    out1, out2 = fwd(x1, x2, padded_params)
    jax.block_until_ready((out1, out2))

    ref1 = _reference_embed(x1, params)
    ref2 = _reference_embed(x2, params)
    assert out1.shape == (B, E) and out2.shape == (B, E)
    assert jnp.allclose(out1, ref1, atol=1e-5, rtol=1e-5)
    assert jnp.allclose(out2, ref2, atol=1e-5, rtol=1e-5)

    print("KERNEL_OK")
</pallas_src>

<mosaic_0001>
module attributes {stable_mosaic.version = 11 : i64} {
  func.func @_siamese_kernel(%arg0: memref<8x16xf32, #tpu.memory_space<vmem>>, %arg1: memref<8x16xf32, #tpu.memory_space<vmem>>, %arg2: memref<16x32xf32, #tpu.memory_space<vmem>>, %arg3: memref<1x32xf32, #tpu.memory_space<vmem>>, %arg4: memref<32x128xf32, #tpu.memory_space<vmem>>, %arg5: memref<1x128xf32, #tpu.memory_space<vmem>>, %arg6: memref<16x128xf32, #tpu.memory_space<vmem>>) attributes {dimension_semantics = [], scalar_prefetch = 0 : i64, scratch_operands = 0 : i64, tpu.core_type = #tpu.core_type<tc>} {
    %c0 = arith.constant 0 : index
    %c0_0 = arith.constant 0 : index
    %0 = vector.load %arg0[%c0, %c0_0] : memref<8x16xf32, #tpu.memory_space<vmem>>, vector<8x16xf32>
    %c0_1 = arith.constant 0 : index
    %c0_2 = arith.constant 0 : index
    %1 = vector.load %arg1[%c0_1, %c0_2] : memref<8x16xf32, #tpu.memory_space<vmem>>, vector<8x16xf32>
    %2 = tpu.concatenate %0, %1 in 0 : vector<8x16xf32>, vector<8x16xf32> -> vector<16x16xf32>
    %c0_3 = arith.constant 0 : index
    %c0_4 = arith.constant 0 : index
    %3 = vector.load %arg2[%c0_3, %c0_4] : memref<16x32xf32, #tpu.memory_space<vmem>>, vector<16x32xf32>
    %cst = arith.constant dense<0.000000e+00> : vector<16x32xf32>
    %4 = tpu.matmul %2, %3, %cst {dimension_numbers = #tpu.dot_dimension_numbers<[1], [0], [0], [1], [0, 0, 1, 1], [], []>} : vector<16x16xf32>, vector<16x32xf32>, vector<16x32xf32> -> vector<16x32xf32>
    %c0_5 = arith.constant 0 : index
    %c0_6 = arith.constant 0 : index
    %5 = vector.load %arg3[%c0_5, %c0_6] : memref<1x32xf32, #tpu.memory_space<vmem>>, vector<1x32xf32>
    %6 = vector.broadcast %5 : vector<1x32xf32> to vector<16x32xf32>
    %7 = arith.addf %4, %6 : vector<16x32xf32>
    %cst_7 = arith.constant 0.000000e+00 : f32
    %8 = vector.broadcast %cst_7 : f32 to vector<16x32xf32>
    %9 = arith.maximumf %7, %8 : vector<16x32xf32>
    %c0_8 = arith.constant 0 : index
    %c0_9 = arith.constant 0 : index
    %10 = vector.load %arg4[%c0_8, %c0_9] : memref<32x128xf32, #tpu.memory_space<vmem>>, vector<32x128xf32>
    %cst_10 = arith.constant dense<0.000000e+00> : vector<16x128xf32>
    %11 = tpu.matmul %9, %10, %cst_10 {dimension_numbers = #tpu.dot_dimension_numbers<[1], [0], [0], [1], [0, 0, 1, 1], [], []>} : vector<16x32xf32>, vector<32x128xf32>, vector<16x128xf32> -> vector<16x128xf32>
    %c0_11 = arith.constant 0 : index
    %c0_12 = arith.constant 0 : index
    %12 = vector.load %arg5[%c0_11, %c0_12] : memref<1x128xf32, #tpu.memory_space<vmem>>, vector<1x128xf32>
    %13 = vector.broadcast %12 : vector<1x128xf32> to vector<16x128xf32>
    %14 = arith.addf %11, %13 : vector<16x128xf32>
    %c0_13 = arith.constant 0 : index
    %c0_14 = arith.constant 0 : index
    %15 = vector.load %arg6[%c0_13, %c0_14] : memref<16x128xf32, #tpu.memory_space<vmem>>, vector<16x128xf32>
    tpu.vector_store %arg6[%c0_13, %c0_14], %14 {strides = array<i32>} : memref<16x128xf32, #tpu.memory_space<vmem>>, vector<16x128xf32>,
    return
  }
}

</mosaic_0001>

<llo_original>
// kernel: siamese_forward.1
$region0: #{siamese_forward.1}
  #allocation0 [shape = 'u32[]', space=smem, size = 0x4, offset = 0x4, fixed_abs, tag = 'smem constant byte address 0x4 - core index']
  #allocation1 [shape = 'u32[144,128]{1,0:T(1,128)}', space=vmem, size = 0x12000, scoped, tag = 'internal scratch']
  %s0 = inlined_call_operand.hbm [shape: f32[8,16], index: 0, kind: input, shape index: {}]
  %s1 = inlined_call_operand.hbm [shape: f32[8,16], index: 1, kind: input, shape index: {}]
  %s2 = inlined_call_operand.hbm [shape: f32[16,32], index: 2, kind: input, shape index: {}]
  %s3 = inlined_call_operand.vmem [shape: f32[1,32], index: 3, kind: input, shape index: {}]
  %s4 = inlined_call_operand.hbm [shape: f32[32,128], index: 4, kind: input, shape index: {}]
  %s5 = inlined_call_operand.vmem [shape: f32[1,128], index: 5, kind: input, shape index: {}]
  %s6 = inlined_call_operand.vmem [shape: f32[16,128], index: 6, kind: output, shape index: {}]
  %s7 = sld [smem:[#allocation0]]
  $region50: #{siamese_forward.1} parent=0
    _
  %s9 = ssub.s32 1, %s7
  %s10 = scalar_select 0, %s9, %s7
  $region1: #{siamese_forward.1} parent=0
    #allocation2 [shape = 'u8[4096]{0}', space=vmem, size = 0x1000, scoped, tag = 'input window, operand 0, single buffered']
    #allocation3 [shape = 's32[1]{0}', space=sflag, size = 0x4, scoped, tag = 'scoped memory for siamese_forward.1']
    #allocation4 [shape = 'u8[4096]{0}', space=vmem, size = 0x1000, scoped, tag = 'input window, operand 1, single buffered']
    #allocation5 [shape = 's32[1]{0}', space=sflag, size = 0x4, scoped, tag = 'scoped memory for siamese_forward.1']
    #allocation6 [shape = 'u8[8192]{0}', space=vmem, size = 0x2000, scoped, tag = 'input window, operand 2, single buffered']
    #allocation7 [shape = 'u8[16384]{0}', space=vmem, size = 0x4000, scoped, tag = 'input window, operand 4, single buffered']
    #allocation8 [shape = 's32[1]{0}', space=sflag, size = 0x4, scoped, tag = 'scoped memory for siamese_forward.1']
    %11 = vsyncpa [#allocation3], 0
    %12 = vsyncpa [#allocation5], 0
    %13 = vsyncpa [#allocation8], 0
    // Predicated region
    $region2: #{siamese_forward.1} parent=1 // pred_check
      _
    $region3: #{siamese_forward.1} parent=1 // pred_check_branch
      %15 = sbr.rel (0) target = $region5
    $region4: #{siamese_forward.1} parent=1 // pred_region
      %s17 = ssub.s32 128, 128
      %18 = vsyncadd [#allocation3], %s17
      %s20 = sshll.u32 [#allocation2], 4
      %s21 = int_to_ptr.vmem [resolvable:$true] %s20
      %23 = dma.hbm_to_vmem [thread:$0]  %s0, 128, %s21, [#allocation3]
    $region5: #{siamese_forward.1} parent=1 // pred_fallthru
      _
    // Predicated region
    $region6: #{siamese_forward.1} parent=1 // pred_check
      _
    $region7: #{siamese_forward.1} parent=1 // pred_check_branch
      %25 = sbr.rel (0) target = $region9
    $region8: #{siamese_forward.1} parent=1 // pred_region
      %s27 = ssub.s32 128, 128
      %28 = vsyncadd [#allocation5], %s27
      %s30 = sshll.u32 [#allocation4], 4
      %s31 = int_to_ptr.vmem [resolvable:$true] %s30
      %33 = dma.hbm_to_vmem [thread:$0]  %s1, 128, %s31, [#allocation5]
    $region9: #{siamese_forward.1} parent=1 // pred_fallthru
      _
    // Predicated region
    $region10: #{siamese_forward.1} parent=1 // pred_check
      _
    $region11: #{siamese_forward.1} parent=1 // pred_check_branch
      %35 = sbr.rel (0) target = $region13
    $region12: #{siamese_forward.1} parent=1 // pred_region
      %s37 = ssub.s32 256, 256
      %38 = vsyncadd [#allocation5], %s37
      %s39 = sshll.u32 [#allocation6], 4
      %s40 = int_to_ptr.vmem [resolvable:$true] %s39
      %45 = dma.hbm_to_vmem [thread:$0]  %s2, 256, %s40, [#allocation5], 128, 128, 8
    $region13: #{siamese_forward.1} parent=1 // pred_fallthru
      _
    // Predicated region
    $region14: #{siamese_forward.1} parent=1 // pred_check
      _
    $region15: #{siamese_forward.1} parent=1 // pred_check_branch
      %47 = sbr.rel (0) target = $region17
    $region16: #{siamese_forward.1} parent=1 // pred_region
      _
    $region17: #{siamese_forward.1} parent=1 // pred_fallthru
      _
    // Predicated region
    $region18: #{siamese_forward.1} parent=1 // pred_check
      _
    $region19: #{siamese_forward.1} parent=1 // pred_check_branch
      %49 = sbr.rel (0) target = $region21
    $region20: #{siamese_forward.1} parent=1 // pred_region
      %s51 = ssub.s32 512, 512
      %52 = vsyncadd [#allocation8], %s51
      %s53 = sshll.u32 [#allocation7], 4
      %s54 = int_to_ptr.vmem [resolvable:$true] %s53
      %59 = dma.hbm_to_vmem [thread:$0]  %s4, 512, %s54, [#allocation8], 128, 128, 8
    $region21: #{siamese_forward.1} parent=1 // pred_fallthru
      _
    // Predicated region
    $region22: #{siamese_forward.1} parent=1 // pred_check
      _
    $region23: #{siamese_forward.1} parent=1 // pred_check_branch
      %61 = sbr.rel (0) target = $region25
    $region24: #{siamese_forward.1} parent=1 // pred_region
      _
    $region25: #{siamese_forward.1} parent=1 // pred_fallthru
      _
    // Predicated region
    $region26: #{siamese_forward.1} parent=1 // pred_check
      _
    $region27: #{siamese_forward.1} parent=1 // pred_check_branch
      %63 = sbr.rel (0) target = $region29
    $region28: #{siamese_forward.1} parent=1 // pred_region
      %64 = dma.done [#allocation3], 128
    $region29: #{siamese_forward.1} parent=1 // pred_fallthru
      _
    // Predicated region
    $region30: #{siamese_forward.1} parent=1 // pred_check
      _
    $region31: #{siamese_forward.1} parent=1 // pred_check_branch
      %66 = sbr.rel (0) target = $region33
    $region32: #{siamese_forward.1} parent=1 // pred_region
      %67 = dma.done [#allocation5], 128
    $region33: #{siamese_forward.1} parent=1 // pred_fallthru
      _
    // Predicated region
    $region34: #{siamese_forward.1} parent=1 // pred_check
      _
    $region35: #{siamese_forward.1} parent=1 // pred_check_branch
      %69 = sbr.rel (0) target = $region37
    $region36: #{siamese_forward.1} parent=1 // pred_region
      %70 = dma.done [#allocation5], 256
    $region37: #{siamese_forward.1} parent=1 // pred_fallthru
      _
    // Predicated region
    $region38: #{siamese_forward.1} parent=1 // pred_check
      _
    $region39: #{siamese_forward.1} parent=1 // pred_check_branch
      %72 = sbr.rel (0) target = $region41
    $region40: #{siamese_forward.1} parent=1 // pred_region
      %73 = dma.done [#allocation8], 512
    $region41: #{siamese_forward.1} parent=1 // pred_fallthru
      _
    %v74 = vld [vmem:[#allocation2] sm:$0xff]
    %v75 = vld [vmem:[#allocation4] sm:$0xff]
    %v76 = vld [vmem:[#allocation6] sm:$0xff]
    %v77 = vld [vmem:[#allocation6 + $0x8] sm:$0xff]
    %v78 = vld [vmem:[%s3] sm:$0x1]
    %v80 = vlaneseq
    %v81 = vshrl.u32 %v80, 7
    %v82 = vsub.s32 0, %v81
    %v83 = vrot.slane %v78, %v82
    %vm85 = vcmask 130048
    %v87 = vsel %vm85, %v74, 0
    %v90 = vsel %vm85, %v75, 0
    %92 = vmatprep.subr.mxu0 0.0
    %93 = vmatpush1.msra.mxu0 %v76
    %94 = vmatprep.subr.mxu0 0.0
    %95 = vmatpush1.msra.mxu0 %v77
    %96 = vmatprep.subr.mxu0 0.0
    %97 = vmatpush1.msra.mxu0 0.0
    %98 = vmatprep.subr.mxu0 0.0
    %99 = vmatpush1.msra.mxu0 0.0
    %100 = vmatprep.subr.mxu0 0.0
    %101 = vmatpush1.msra.mxu0 0.0
    %102 = vmatprep.subr.mxu0 0.0
    %103 = vmatpush1.msra.mxu0 0.0
    %104 = vmatprep.subr.mxu0 0.0
    %105 = vmatpush1.msra.mxu0 0.0
    %106 = vmatprep.subr.mxu0 0.0
    %107 = vmatpush1.msra.mxu0 0.0
    %108 = vmatprep.subr.mxu0 0.0
    %109 = vmatpush1.msra.mxu0 0.0
    %110 = vmatprep.subr.mxu0 0.0
    %111 = vmatpush1.msra.mxu0 0.0
    %112 = vmatprep.subr.mxu0 0.0
    %113 = vmatpush1.msra.mxu0 0.0
    %114 = vmatprep.subr.mxu0 0.0
    %115 = vmatpush1.msra.mxu0 0.0
    %116 = vmatprep.subr.mxu0 0.0
    %117 = vmatpush1.msra.mxu0 0.0
    %118 = vmatprep.subr.mxu0 0.0
    %119 = vmatpush1.msra.mxu0 0.0
    %120 = vmatprep.subr.mxu0 0.0
    %121 = vmatpush1.msra.mxu0 0.0
    %122 = vmatprep.subr.mxu0 0.0
    %123 = vmatpush1.msra.mxu0 0.0
    %124 = vmatprep.subr.mxu0 0.0
    %125 = vmatpush1.msra.mxu0 0.0
    %126 = vmatprep.subr.mxu0 0.0
    %127 = vmatpush1.msra.mxu0 0.0
    %128 = vmatprep.subr.mxu0 0.0
    %129 = vmatpush1.msra.mxu0 0.0
    %130 = vmatprep.subr.mxu0 0.0
    %131 = vmatpush1.msra.mxu0 0.0
    %132 = vmatprep.subr.mxu0 0.0
    %133 = vmatpush1.msra.mxu0 0.0
    %134 = vmatprep.subr.mxu0 0.0
    %135 = vmatpush1.msra.mxu0 0.0
    %136 = vmatprep.subr.mxu0 0.0
    %137 = vmatpush1.msra.mxu0 0.0
    %138 = vmatprep.subr.mxu0 0.0
    %139 = vmatpush1.msra.mxu0 0.0
    %140 = vmatprep.subr.mxu0 0.0
    %141 = vmatpush1.msra.mxu0 0.0
    %142 = vmatprep.subr.mxu0 0.0
    %143 = vmatpush1.msra.mxu0 0.0
    %144 = vmatprep.subr.mxu0 0.0
    %145 = vmatpush1.msra.mxu0 0.0
    %146 = vmatprep.subr.mxu0 0.0
    %147 = vmatpush1.msra.mxu0 0.0
    %148 = vmatprep.subr.mxu0 0.0
    %149 = vmatpush1.msra.mxu0 0.0
    %150 = vmatprep.subr.mxu0 0.0
    %151 = vmatpush1.msra.mxu0 0.0
    %152 = vmatprep.subr.mxu0 0.0
    %153 = vmatpush1.msra.mxu0 0.0
    %154 = vmatprep.subr.mxu0 0.0
    %155 = vmatpush1.msra.mxu0 0.0
    %156 = vmatprep.mubr.f32.mxu0 0.0
    %157 = vmatmul.mubr.f32.gmra.mrb[0].mxu0 %v87
    %v158 = vpop.f32.mrb[0].mxu0
    %v159 = vadd.f32 %v83, %v158
    %v160 = vpop.f32.mrb[0].mxu0
    %161 = vmatprep.mubr.f32.mxu0 0.0
    %162 = vmatmul.mubr.f32.gmra.mrb[0].mxu0 %v90
    %v163 = vpop.f32.mrb[0].mxu0
    %v164 = vadd.f32 %v83, %v163
    %v165 = vpop.f32.mrb[0].mxu0
    %166 = vdwg.mxu0
    %v167 = vmax.f32 %v159, 0.0
    %v168 = vmax.f32 %v164, 0.0
    %v169 = vld [vmem:[#allocation7] sm:$0xff]
    %v170 = vld [vmem:[#allocation7 + $0x8] sm:$0xff]
    %v171 = vld [vmem:[#allocation7 + $0x10] sm:$0xff]
    %v172 = vld [vmem:[#allocation7 + $0x18] sm:$0xff]
    %v173 = vld [vmem:[%s5] sm:$0x1]
    %v175 = vlaneseq
    %v176 = vshrl.u32 %v175, 7
    %v177 = vsub.s32 0, %v176
    %v178 = vrot.slane %v173, %v177
    %vm180 = vcmask 261120
    %v182 = vsel %vm180, %v167, 0
    %v185 = vsel %vm180, %v168, 0
    %187 = vmatprep.subr.mxu0 0.0
    %188 = vmatpush1.msra.mxu0 %v169
    %189 = vmatprep.subr.mxu0 0.0
    %190 = vmatpush1.msra.mxu0 %v170
    %191 = vmatprep.subr.mxu0 0.0
    %192 = vmatpush1.msra.mxu0 %v171
    %193 = vmatprep.subr.mxu0 0.0
    %194 = vmatpush1.msra.mxu0 %v172
    %195 = vmatprep.subr.mxu0 0.0
    %196 = vmatpush1.msra.mxu0 0.0
    %197 = vmatprep.subr.mxu0 0.0
    %198 = vmatpush1.msra.mxu0 0.0
    %199 = vmatprep.subr.mxu0 0.0
    %200 = vmatpush1.msra.mxu0 0.0
    %201 = vmatprep.subr.mxu0 0.0
    %202 = vmatpush1.msra.mxu0 0.0
    %203 = vmatprep.subr.mxu0 0.0
    %204 = vmatpush1.msra.mxu0 0.0
    %205 = vmatprep.subr.mxu0 0.0
    %206 = vmatpush1.msra.mxu0 0.0
    %207 = vmatprep.subr.mxu0 0.0
    %208 = vmatpush1.msra.mxu0 0.0
    %209 = vmatprep.subr.mxu0 0.0
    %210 = vmatpush1.msra.mxu0 0.0
    %211 = vmatprep.subr.mxu0 0.0
    %212 = vmatpush1.msra.mxu0 0.0
    %213 = vmatprep.subr.mxu0 0.0
    %214 = vmatpush1.msra.mxu0 0.0
    %215 = vmatprep.subr.mxu0 0.0
    %216 = vmatpush1.msra.mxu0 0.0
    %217 = vmatprep.subr.mxu0 0.0
    %218 = vmatpush1.msra.mxu0 0.0
    %219 = vmatprep.subr.mxu0 0.0
    %220 = vmatpush1.msra.mxu0 0.0
    %221 = vmatprep.subr.mxu0 0.0
    %222 = vmatpush1.msra.mxu0 0.0
    %223 = vmatprep.subr.mxu0 0.0
    %224 = vmatpush1.msra.mxu0 0.0
    %225 = vmatprep.subr.mxu0 0.0
    %226 = vmatpush1.msra.mxu0 0.0
    %227 = vmatprep.subr.mxu0 0.0
    %228 = vmatpush1.msra.mxu0 0.0
    %229 = vmatprep.subr.mxu0 0.0
    %230 = vmatpush1.msra.mxu0 0.0
    %231 = vmatprep.subr.mxu0 0.0
    %232 = vmatpush1.msra.mxu0 0.0
    %233 = vmatprep.subr.mxu0 0.0
    %234 = vmatpush1.msra.mxu0 0.0
    %235 = vmatprep.subr.mxu0 0.0
    %236 = vmatpush1.msra.mxu0 0.0
    %237 = vmatprep.subr.mxu0 0.0
    %238 = vmatpush1.msra.mxu0 0.0
    %239 = vmatprep.subr.mxu0 0.0
    %240 = vmatpush1.msra.mxu0 0.0
    %241 = vmatprep.subr.mxu0 0.0
    %242 = vmatpush1.msra.mxu0 0.0
    %243 = vmatprep.subr.mxu0 0.0
    %244 = vmatpush1.msra.mxu0 0.0
    %245 = vmatprep.subr.mxu0 0.0
    %246 = vmatpush1.msra.mxu0 0.0
    %247 = vmatprep.subr.mxu0 0.0
    %248 = vmatpush1.msra.mxu0 0.0
    %249 = vmatprep.subr.mxu0 0.0
    %250 = vmatpush1.msra.mxu0 0.0
    %251 = vmatprep.mubr.f32.mxu0 0.0
    %252 = vmatmul.mubr.f32.gmra.mrb[0].mxu0 %v182
    %v253 = vpop.f32.mrb[0].mxu0
    %v254 = vadd.f32 %v178, %v253
    %v255 = vpop.f32.mrb[0].mxu0
    %256 = vmatprep.mubr.f32.mxu0 0.0
    %257 = vmatmul.mubr.f32.gmra.mrb[0].mxu0 %v185
    %v258 = vpop.f32.mrb[0].mxu0
    %v259 = vadd.f32 %v178, %v258
    %v260 = vpop.f32.mrb[0].mxu0
    %261 = vdwg.mxu0
    %262 = vst [vmem:[%s6] sm:$0xff] %v254
    %263 = vst [vmem:[%s6 + $0x8] sm:$0xff] %v259
    // Predicated region
    $region42: #{siamese_forward.1} parent=1 // pred_check
      _
    $region43: #{siamese_forward.1} parent=1 // pred_check_branch
      %265 = sbr.rel (0) target = $region45
    $region44: #{siamese_forward.1} parent=1 // pred_region
      _
    $region45: #{siamese_forward.1} parent=1 // pred_fallthru
      _
    // Predicated region
    $region46: #{siamese_forward.1} parent=1 // pred_check
      _
    $region47: #{siamese_forward.1} parent=1 // pred_check_branch
      %267 = sbr.rel (0) target = $region49
    $region48: #{siamese_forward.1} parent=1 // pred_region
      _
    $region49: #{siamese_forward.1} parent=1 // pred_fallthru
      _
    %268 = vsyncpa [#allocation3], 1
    %269 = vsyncpa [#allocation5], 1
    %270 = vsyncpa [#allocation8], 1

</llo_original>
